<compile_context>
chip_gen: v5e
topology: v5e:2x2
jax: 0.10.0
libtpu: 0.0.40
codegen_flags: <defaults>
</compile_context>

<pallas_src>
import functools

import numpy as np
import jax
import jax.numpy as jnp
from jax.experimental import pallas as pl
from jax.experimental.pallas import tpu as pltpu

NUM_BINS = 10
_LANE = 128
# 1024 rows x 128 lanes x 2 channels x f32 = 1 MiB per input block; with two
# inputs double-buffered plus elementwise temporaries this stays well under a
# 32 MiB scoped-VMEM budget on v5e/v6e/v7x.
_MAX_TILE_ROWS = 1024


# ---------------------------------------------------------------------------
# Host-side glue mirroring the PyTorch module's __init__ (histogram over a
# synthetic "dataloader" of targets).
# TODO(synk): the real module iterates a torch DataLoader; here the stats are
# computed from arrays passed in (host numpy, not a kernel).
# ---------------------------------------------------------------------------
def precompute_bins_and_weights(target_samples_a, target_samples_b, num_bins=NUM_BINS):
    a_values = np.asarray(target_samples_a, dtype=np.float32).ravel()
    b_values = np.asarray(target_samples_b, dtype=np.float32).ravel()

    a_edges = np.linspace(a_values.min(), a_values.max(), num=num_bins + 1)
    b_edges = np.linspace(b_values.min(), b_values.max(), num=num_bins + 1)

    a_counts, _ = np.histogram(a_values, bins=a_edges)
    b_counts, _ = np.histogram(b_values, bins=b_edges)
    a_counts[a_counts == 0] = 1
    b_counts[b_counts == 0] = 1

    a_weights = 1.0 / np.sqrt(a_counts)
    b_weights = 1.0 / np.sqrt(b_counts)
    a_weights /= a_weights.sum() / num_bins
    b_weights /= b_weights.sum() / num_bins

    return (jnp.asarray(a_edges, jnp.float32), jnp.asarray(b_edges, jnp.float32),
            jnp.asarray(a_weights, jnp.float32), jnp.asarray(b_weights, jnp.float32))


# ---------------------------------------------------------------------------
# Pallas kernel.
# Grid: (B, n_tiles) with batch "parallel", tiles "arbitrary".
# Per batch: zero an (8,128) VMEM accumulator at t==0, add per-tile partial
# sums each step, dump the raw accumulator to the per-batch output row at the
# last tile.  Wrapper reduces and applies the mean.
# ---------------------------------------------------------------------------
def _wcl_kernel(edges_a_ref, edges_b_ref, wa_ref, wb_ref,
                inp_ref, tgt_ref, out_ref, acc_ref, *, num_bins):
    t = pl.program_id(1)

    @pl.when(t == 0)
    def _():
        acc_ref[...] = jnp.zeros_like(acc_ref)

    # Block is (2, tile_rows, 128): channel 0 = "a", channel 1 = "b".
    ia = inp_ref[0]
    ib = inp_ref[1]
    ta = tgt_ref[0]
    tb = tgt_ref[1]

    def bucket_weights(t_vals, edges_ref, w_ref):
        # weights[clip(bucketize(t, edges, right=False) - 1, 0, nb-1)]
        # Since edges are sorted ascending, the indicators [t > edges[k]] form
        # a prefix, so a pure select chain (cmp+select per bin) is exact.
        w = jnp.full(t_vals.shape, w_ref[0], dtype=jnp.float32)
        for k in range(1, num_bins):
            w = jnp.where(t_vals > edges_ref[k], w_ref[k], w)
        return w

    def smooth_l1(x, y):  # nn.SmoothL1Loss(reduction='none'), beta=1.0, branchless
        d = x - y
        ad = jnp.abs(d)
        c = jnp.minimum(ad, 1.0)
        return c * (ad - 0.5 * c)

    wa = bucket_weights(ta, edges_a_ref, wa_ref)
    wb = bucket_weights(tb, edges_b_ref, wb_ref)

    tile_loss = smooth_l1(ia, ta) * wa + smooth_l1(ib, tb) * wb  # (tile_rows, 128)
    # Fold sublane groups of 8 into the vreg-shaped accumulator (pure VPU adds).
    acc_ref[...] += jnp.sum(tile_loss.reshape(-1, 8, tile_loss.shape[-1]), axis=0)

    @pl.when(t == pl.num_programs(1) - 1)
    def _():
        out_ref[...] = acc_ref[...]


def weighted_color_loss(inp, target, edges_a, edges_b, weights_a, weights_b,
                        num_bins=NUM_BINS):
    """inp, target: [B, C, H, W] (C >= 2), float32. Returns scalar mean loss."""
    B, C, H, W = inp.shape
    assert C >= 2
    hw = H * W

    # Rows of 128 lanes, rounded up to a multiple of 8 sublanes.
    rows_raw = -(-hw // _LANE)
    rows_raw = -(-rows_raw // 8) * 8

    if rows_raw <= _MAX_TILE_ROWS:
        tile_rows = rows_raw
    else:
        # Prefer an exact large divisor; otherwise pad up to 512-row tiles.
        tile_rows = 512
        for cand in (1024, 512, 256):
            if rows_raw % cand == 0:
                tile_rows = cand
                break
    rows = -(-rows_raw // tile_rows) * tile_rows
    n_tiles = rows // tile_rows
    hw_pad = rows * _LANE

    if hw_pad == hw:
        # Free reshape; the BlockSpec pulls channels 0-1 straight out of HBM,
        # no wrapper-side slicing copy even when C > 2.
        inp_r = inp.reshape(B, C, rows, _LANE)
        tgt_r = target.reshape(B, C, rows, _LANE)
    else:
        # Padding materializes a copy anyway, so keep it to the 2 chroma
        # channels.  Padded positions have inp == tgt == 0, so smooth_l1 == 0
        # and the total sum is unchanged.
        pad = hw_pad - hw
        inp_r = jnp.pad(inp[:, :2].reshape(B, 2, hw),
                        ((0, 0), (0, 0), (0, pad))).reshape(B, 2, rows, _LANE)
        tgt_r = jnp.pad(target[:, :2].reshape(B, 2, hw),
                        ((0, 0), (0, 0), (0, pad))).reshape(B, 2, rows, _LANE)

    data_spec = pl.BlockSpec((None, 2, tile_rows, _LANE),
                             lambda b, t: (b, 0, t, 0))
    smem_whole = pl.BlockSpec(memory_space=pltpu.MemorySpace.SMEM)

    partials = pl.pallas_call(
        functools.partial(_wcl_kernel, num_bins=num_bins),
        grid=(B, n_tiles),
        in_specs=[smem_whole, smem_whole, smem_whole, smem_whole,
                  data_spec, data_spec],
        out_specs=pl.BlockSpec((None, 8, _LANE), lambda b, t: (b, 0, 0)),
        out_shape=jax.ShapeDtypeStruct((B, 8, _LANE), jnp.float32),
        scratch_shapes=[pltpu.VMEM((8, _LANE), jnp.float32)],
        compiler_params=pltpu.CompilerParams(
            dimension_semantics=("parallel", "arbitrary"),
            vmem_limit_bytes=32 * 1024 * 1024),
    )(edges_a, edges_b, weights_a, weights_b, inp_r, tgt_r)

    # Mean over the real (unpadded) element count, matching torch's .mean().
    return jnp.sum(partials) / jnp.float32(B * H * W)


# ---------------------------------------------------------------------------
# Pure-JAX reference for verification (matches torch.bucketize right=False).
# ---------------------------------------------------------------------------
def weighted_color_loss_ref(inp, target, edges_a, edges_b, weights_a, weights_b,
                            num_bins=NUM_BINS):
    ta = target[:, 0, :, :]
    tb = target[:, 1, :, :]
    idx_a = jnp.clip(jnp.searchsorted(edges_a, ta, side='left') - 1, 0, num_bins - 1)
    idx_b = jnp.clip(jnp.searchsorted(edges_b, tb, side='left') - 1, 0, num_bins - 1)
    wa = weights_a[idx_a]
    wb = weights_b[idx_b]

    def smooth_l1(x, y):
        d = x - y
        ad = jnp.abs(d)
        return jnp.where(ad < 1.0, 0.5 * d * d, ad - 0.5)

    a_loss = smooth_l1(inp[:, 0, :, :], ta) * wa
    b_loss = smooth_l1(inp[:, 1, :, :], tb) * wb
    return jnp.mean(a_loss + b_loss)


if __name__ == "__main__":
    key = jax.random.PRNGKey(0)
    k_in, k_tg, k_in2, k_tg2 = jax.random.split(key, 4)

    # Case 1: C=4, hw=256 (non-aligned -> padding path).
    B, C, H, W = 2, 4, 16, 16
    inp = jax.random.normal(k_in, (B, C, H, W), dtype=jnp.float32)
    target = jax.random.normal(k_tg, (B, C, H, W), dtype=jnp.float32) * 1.5

    # Synthetic "dataloader" statistics: use the target batch itself.
    edges_a, edges_b, weights_a, weights_b = precompute_bins_and_weights(
        target[:, 0, :, :], target[:, 1, :, :], NUM_BINS)

    loss = weighted_color_loss(inp, target, edges_a, edges_b, weights_a, weights_b)
    loss = jax.block_until_ready(loss)
    loss_ref = weighted_color_loss_ref(inp, target, edges_a, edges_b,
                                       weights_a, weights_b)
    assert jnp.allclose(loss, loss_ref, rtol=1e-5, atol=1e-6), (loss, loss_ref)

    # Case 2: C=4, hw=1024 (aligned -> channels pulled by BlockSpec, no pad).
    B2, C2, H2, W2 = 2, 4, 32, 32
    inp2 = jax.random.normal(k_in2, (B2, C2, H2, W2), dtype=jnp.float32)
    target2 = jax.random.normal(k_tg2, (B2, C2, H2, W2), dtype=jnp.float32) * 1.5
    loss2 = weighted_color_loss(inp2, target2, edges_a, edges_b,
                                weights_a, weights_b)
    loss2 = jax.block_until_ready(loss2)
    loss2_ref = weighted_color_loss_ref(inp2, target2, edges_a, edges_b,
                                        weights_a, weights_b)
    assert jnp.allclose(loss2, loss2_ref, rtol=1e-5, atol=1e-6), (loss2, loss2_ref)

    print("KERNEL_OK")
</pallas_src>

<mosaic_0001>
module attributes {stable_mosaic.version = 11 : i64} {
  func.func @_wcl_kernel(%arg0: i32, %arg1: i32, %arg2: memref<11xf32, #tpu.memory_space<smem>>, %arg3: memref<11xf32, #tpu.memory_space<smem>>, %arg4: memref<10xf32, #tpu.memory_space<smem>>, %arg5: memref<10xf32, #tpu.memory_space<smem>>, %arg6: memref<1x2x8x128xf32, #tpu.memory_space<vmem>>, %arg7: memref<1x2x8x128xf32, #tpu.memory_space<vmem>>, %arg8: memref<1x8x128xf32, #tpu.memory_space<vmem>>, %arg9: memref<8x128xf32, #tpu.memory_space<vmem>>) attributes {dimension_semantics = [#tpu.dimension_semantics<parallel>, #tpu.dimension_semantics<arbitrary>], iteration_bounds = array<i64: 2, 1>, scalar_prefetch = 0 : i64, scratch_operands = 1 : i64, tpu.core_type = #tpu.core_type<tc>, window_params = [{transform_indices = @transform_0, window_bounds = array<i64: 11>}, {transform_indices = @transform_1, window_bounds = array<i64: 11>}, {transform_indices = @transform_2, window_bounds = array<i64: 10>}, {transform_indices = @transform_3, window_bounds = array<i64: 10>}, {transform_indices = @transform_4, window_bounds = array<i64: 1, 2, 8, 128>}, {transform_indices = @transform_5, window_bounds = array<i64: 1, 2, 8, 128>}, {transform_indices = @transform_6, window_bounds = array<i64: 1, 8, 128>}]} {
    %c0_i32 = arith.constant 0 : i32
    %0 = arith.cmpi eq, %arg1, %c0_i32 : i32
    %1 = arith.extui %0 : i1 to i32
    %c0_i32_0 = arith.constant 0 : i32
    %2 = arith.cmpi ne, %1, %c0_i32_0 : i32
    scf.if %2 {
      %cst_55 = arith.constant 0.000000e+00 : f32
      %150 = vector.broadcast %cst_55 : f32 to vector<8x128xf32>
      %c0_56 = arith.constant 0 : index
      %c0_57 = arith.constant 0 : index
      %151 = vector.load %arg9[%c0_56, %c0_57] : memref<8x128xf32, #tpu.memory_space<vmem>>, vector<8x128xf32>
      tpu.vector_store %arg9[%c0_56, %c0_57], %150 {strides = array<i32>} : memref<8x128xf32, #tpu.memory_space<vmem>>, vector<8x128xf32>,
    } else {
    }
    %c0 = arith.constant 0 : index
    %c0_1 = arith.constant 0 : index
    %c0_2 = arith.constant 0 : index
    %c0_3 = arith.constant 0 : index
    %3 = vector.load %arg6[%c0, %c0_1, %c0_2, %c0_3] : memref<1x2x8x128xf32, #tpu.memory_space<vmem>>, vector<1x1x8x128xf32>
    %4 = vector.shape_cast %3 : vector<1x1x8x128xf32> to vector<8x128xf32>
    %c0_4 = arith.constant 0 : index
    %c1 = arith.constant 1 : index
    %c0_5 = arith.constant 0 : index
    %c0_6 = arith.constant 0 : index
    %5 = vector.load %arg6[%c0_4, %c1, %c0_5, %c0_6] : memref<1x2x8x128xf32, #tpu.memory_space<vmem>>, vector<1x1x8x128xf32>
    %6 = vector.shape_cast %5 : vector<1x1x8x128xf32> to vector<8x128xf32>
    %c0_7 = arith.constant 0 : index
    %c0_8 = arith.constant 0 : index
    %c0_9 = arith.constant 0 : index
    %c0_10 = arith.constant 0 : index
    %7 = vector.load %arg7[%c0_7, %c0_8, %c0_9, %c0_10] : memref<1x2x8x128xf32, #tpu.memory_space<vmem>>, vector<1x1x8x128xf32>
    %8 = vector.shape_cast %7 : vector<1x1x8x128xf32> to vector<8x128xf32>
    %c0_11 = arith.constant 0 : index
    %c1_12 = arith.constant 1 : index
    %c0_13 = arith.constant 0 : index
    %c0_14 = arith.constant 0 : index
    %9 = vector.load %arg7[%c0_11, %c1_12, %c0_13, %c0_14] : memref<1x2x8x128xf32, #tpu.memory_space<vmem>>, vector<1x1x8x128xf32>
    %10 = vector.shape_cast %9 : vector<1x1x8x128xf32> to vector<8x128xf32>
    %c0_15 = arith.constant 0 : index
    %11 = memref.load %arg4[%c0_15] : memref<10xf32, #tpu.memory_space<smem>>
    %12 = vector.broadcast %11 : f32 to vector<8x128xf32>
    %c1_16 = arith.constant 1 : index
    %13 = memref.load %arg2[%c1_16] : memref<11xf32, #tpu.memory_space<smem>>
    %14 = vector.broadcast %13 : f32 to vector<8x128xf32>
    %15 = arith.cmpf ogt, %8, %14 : vector<8x128xf32>
    %c1_17 = arith.constant 1 : index
    %16 = memref.load %arg4[%c1_17] : memref<10xf32, #tpu.memory_space<smem>>
    %17 = vector.broadcast %16 : f32 to vector<8x128xf32>
    %18 = arith.select %15, %17, %12 : vector<8x128xi1>, vector<8x128xf32>
    %c2 = arith.constant 2 : index
    %19 = memref.load %arg2[%c2] : memref<11xf32, #tpu.memory_space<smem>>
    %20 = vector.broadcast %19 : f32 to vector<8x128xf32>
    %21 = arith.cmpf ogt, %8, %20 : vector<8x128xf32>
    %c2_18 = arith.constant 2 : index
    %22 = memref.load %arg4[%c2_18] : memref<10xf32, #tpu.memory_space<smem>>
    %23 = vector.broadcast %22 : f32 to vector<8x128xf32>
    %24 = arith.select %21, %23, %18 : vector<8x128xi1>, vector<8x128xf32>
    %c3 = arith.constant 3 : index
    %25 = memref.load %arg2[%c3] : memref<11xf32, #tpu.memory_space<smem>>
    %26 = vector.broadcast %25 : f32 to vector<8x128xf32>
    %27 = arith.cmpf ogt, %8, %26 : vector<8x128xf32>
    %c3_19 = arith.constant 3 : index
    %28 = memref.load %arg4[%c3_19] : memref<10xf32, #tpu.memory_space<smem>>
    %29 = vector.broadcast %28 : f32 to vector<8x128xf32>
    %30 = arith.select %27, %29, %24 : vector<8x128xi1>, vector<8x128xf32>
    %c4 = arith.constant 4 : index
    %31 = memref.load %arg2[%c4] : memref<11xf32, #tpu.memory_space<smem>>
    %32 = vector.broadcast %31 : f32 to vector<8x128xf32>
    %33 = arith.cmpf ogt, %8, %32 : vector<8x128xf32>
    %c4_20 = arith.constant 4 : index
    %34 = memref.load %arg4[%c4_20] : memref<10xf32, #tpu.memory_space<smem>>
    %35 = vector.broadcast %34 : f32 to vector<8x128xf32>
    %36 = arith.select %33, %35, %30 : vector<8x128xi1>, vector<8x128xf32>
    %c5 = arith.constant 5 : index
    %37 = memref.load %arg2[%c5] : memref<11xf32, #tpu.memory_space<smem>>
    %38 = vector.broadcast %37 : f32 to vector<8x128xf32>
    %39 = arith.cmpf ogt, %8, %38 : vector<8x128xf32>
    %c5_21 = arith.constant 5 : index
    %40 = memref.load %arg4[%c5_21] : memref<10xf32, #tpu.memory_space<smem>>
    %41 = vector.broadcast %40 : f32 to vector<8x128xf32>
    %42 = arith.select %39, %41, %36 : vector<8x128xi1>, vector<8x128xf32>
    %c6 = arith.constant 6 : index
    %43 = memref.load %arg2[%c6] : memref<11xf32, #tpu.memory_space<smem>>
    %44 = vector.broadcast %43 : f32 to vector<8x128xf32>
    %45 = arith.cmpf ogt, %8, %44 : vector<8x128xf32>
    %c6_22 = arith.constant 6 : index
    %46 = memref.load %arg4[%c6_22] : memref<10xf32, #tpu.memory_space<smem>>
    %47 = vector.broadcast %46 : f32 to vector<8x128xf32>
    %48 = arith.select %45, %47, %42 : vector<8x128xi1>, vector<8x128xf32>
    %c7 = arith.constant 7 : index
    %49 = memref.load %arg2[%c7] : memref<11xf32, #tpu.memory_space<smem>>
    %50 = vector.broadcast %49 : f32 to vector<8x128xf32>
    %51 = arith.cmpf ogt, %8, %50 : vector<8x128xf32>
    %c7_23 = arith.constant 7 : index
    %52 = memref.load %arg4[%c7_23] : memref<10xf32, #tpu.memory_space<smem>>
    %53 = vector.broadcast %52 : f32 to vector<8x128xf32>
    %54 = arith.select %51, %53, %48 : vector<8x128xi1>, vector<8x128xf32>
    %c8 = arith.constant 8 : index
    %55 = memref.load %arg2[%c8] : memref<11xf32, #tpu.memory_space<smem>>
    %56 = vector.broadcast %55 : f32 to vector<8x128xf32>
    %57 = arith.cmpf ogt, %8, %56 : vector<8x128xf32>
    %c8_24 = arith.constant 8 : index
    %58 = memref.load %arg4[%c8_24] : memref<10xf32, #tpu.memory_space<smem>>
    %59 = vector.broadcast %58 : f32 to vector<8x128xf32>
    %60 = arith.select %57, %59, %54 : vector<8x128xi1>, vector<8x128xf32>
    %c9 = arith.constant 9 : index
    %61 = memref.load %arg2[%c9] : memref<11xf32, #tpu.memory_space<smem>>
    %62 = vector.broadcast %61 : f32 to vector<8x128xf32>
    %63 = arith.cmpf ogt, %8, %62 : vector<8x128xf32>
    %c9_25 = arith.constant 9 : index
    %64 = memref.load %arg4[%c9_25] : memref<10xf32, #tpu.memory_space<smem>>
    %65 = vector.broadcast %64 : f32 to vector<8x128xf32>
    %66 = arith.select %63, %65, %60 : vector<8x128xi1>, vector<8x128xf32>
    %c0_26 = arith.constant 0 : index
    %67 = memref.load %arg5[%c0_26] : memref<10xf32, #tpu.memory_space<smem>>
    %68 = vector.broadcast %67 : f32 to vector<8x128xf32>
    %c1_27 = arith.constant 1 : index
    %69 = memref.load %arg3[%c1_27] : memref<11xf32, #tpu.memory_space<smem>>
    %70 = vector.broadcast %69 : f32 to vector<8x128xf32>
    %71 = arith.cmpf ogt, %10, %70 : vector<8x128xf32>
    %c1_28 = arith.constant 1 : index
    %72 = memref.load %arg5[%c1_28] : memref<10xf32, #tpu.memory_space<smem>>
    %73 = vector.broadcast %72 : f32 to vector<8x128xf32>
    %74 = arith.select %71, %73, %68 : vector<8x128xi1>, vector<8x128xf32>
    %c2_29 = arith.constant 2 : index
    %75 = memref.load %arg3[%c2_29] : memref<11xf32, #tpu.memory_space<smem>>
    %76 = vector.broadcast %75 : f32 to vector<8x128xf32>
    %77 = arith.cmpf ogt, %10, %76 : vector<8x128xf32>
    %c2_30 = arith.constant 2 : index
    %78 = memref.load %arg5[%c2_30] : memref<10xf32, #tpu.memory_space<smem>>
    %79 = vector.broadcast %78 : f32 to vector<8x128xf32>
    %80 = arith.select %77, %79, %74 : vector<8x128xi1>, vector<8x128xf32>
    %c3_31 = arith.constant 3 : index
    %81 = memref.load %arg3[%c3_31] : memref<11xf32, #tpu.memory_space<smem>>
    %82 = vector.broadcast %81 : f32 to vector<8x128xf32>
    %83 = arith.cmpf ogt, %10, %82 : vector<8x128xf32>
    %c3_32 = arith.constant 3 : index
    %84 = memref.load %arg5[%c3_32] : memref<10xf32, #tpu.memory_space<smem>>
    %85 = vector.broadcast %84 : f32 to vector<8x128xf32>
    %86 = arith.select %83, %85, %80 : vector<8x128xi1>, vector<8x128xf32>
    %c4_33 = arith.constant 4 : index
    %87 = memref.load %arg3[%c4_33] : memref<11xf32, #tpu.memory_space<smem>>
    %88 = vector.broadcast %87 : f32 to vector<8x128xf32>
    %89 = arith.cmpf ogt, %10, %88 : vector<8x128xf32>
    %c4_34 = arith.constant 4 : index
    %90 = memref.load %arg5[%c4_34] : memref<10xf32, #tpu.memory_space<smem>>
    %91 = vector.broadcast %90 : f32 to vector<8x128xf32>
    %92 = arith.select %89, %91, %86 : vector<8x128xi1>, vector<8x128xf32>
    %c5_35 = arith.constant 5 : index
    %93 = memref.load %arg3[%c5_35] : memref<11xf32, #tpu.memory_space<smem>>
    %94 = vector.broadcast %93 : f32 to vector<8x128xf32>
    %95 = arith.cmpf ogt, %10, %94 : vector<8x128xf32>
    %c5_36 = arith.constant 5 : index
    %96 = memref.load %arg5[%c5_36] : memref<10xf32, #tpu.memory_space<smem>>
    %97 = vector.broadcast %96 : f32 to vector<8x128xf32>
    %98 = arith.select %95, %97, %92 : vector<8x128xi1>, vector<8x128xf32>
    %c6_37 = arith.constant 6 : index
    %99 = memref.load %arg3[%c6_37] : memref<11xf32, #tpu.memory_space<smem>>
    %100 = vector.broadcast %99 : f32 to vector<8x128xf32>
    %101 = arith.cmpf ogt, %10, %100 : vector<8x128xf32>
    %c6_38 = arith.constant 6 : index
    %102 = memref.load %arg5[%c6_38] : memref<10xf32, #tpu.memory_space<smem>>
    %103 = vector.broadcast %102 : f32 to vector<8x128xf32>
    %104 = arith.select %101, %103, %98 : vector<8x128xi1>, vector<8x128xf32>
    %c7_39 = arith.constant 7 : index
    %105 = memref.load %arg3[%c7_39] : memref<11xf32, #tpu.memory_space<smem>>
    %106 = vector.broadcast %105 : f32 to vector<8x128xf32>
    %107 = arith.cmpf ogt, %10, %106 : vector<8x128xf32>
    %c7_40 = arith.constant 7 : index
    %108 = memref.load %arg5[%c7_40] : memref<10xf32, #tpu.memory_space<smem>>
    %109 = vector.broadcast %108 : f32 to vector<8x128xf32>
    %110 = arith.select %107, %109, %104 : vector<8x128xi1>, vector<8x128xf32>
    %c8_41 = arith.constant 8 : index
    %111 = memref.load %arg3[%c8_41] : memref<11xf32, #tpu.memory_space<smem>>
    %112 = vector.broadcast %111 : f32 to vector<8x128xf32>
    %113 = arith.cmpf ogt, %10, %112 : vector<8x128xf32>
    %c8_42 = arith.constant 8 : index
    %114 = memref.load %arg5[%c8_42] : memref<10xf32, #tpu.memory_space<smem>>
    %115 = vector.broadcast %114 : f32 to vector<8x128xf32>
    %116 = arith.select %113, %115, %110 : vector<8x128xi1>, vector<8x128xf32>
    %c9_43 = arith.constant 9 : index
    %117 = memref.load %arg3[%c9_43] : memref<11xf32, #tpu.memory_space<smem>>
    %118 = vector.broadcast %117 : f32 to vector<8x128xf32>
    %119 = arith.cmpf ogt, %10, %118 : vector<8x128xf32>
    %c9_44 = arith.constant 9 : index
    %120 = memref.load %arg5[%c9_44] : memref<10xf32, #tpu.memory_space<smem>>
    %121 = vector.broadcast %120 : f32 to vector<8x128xf32>
    %122 = arith.select %119, %121, %116 : vector<8x128xi1>, vector<8x128xf32>
    %123 = arith.subf %4, %8 : vector<8x128xf32>
    %124 = math.absf %123 : vector<8x128xf32>
    %cst = arith.constant 1.000000e+00 : f32
    %125 = vector.broadcast %cst : f32 to vector<8x128xf32>
    %126 = arith.minimumf %124, %125 : vector<8x128xf32>
    %cst_45 = arith.constant 5.000000e-01 : f32
    %127 = vector.broadcast %cst_45 : f32 to vector<8x128xf32>
    %128 = arith.mulf %127, %126 : vector<8x128xf32>
    %129 = arith.subf %124, %128 : vector<8x128xf32>
    %130 = arith.mulf %126, %129 : vector<8x128xf32>
    %131 = arith.mulf %130, %66 : vector<8x128xf32>
    %132 = arith.subf %6, %10 : vector<8x128xf32>
    %133 = math.absf %132 : vector<8x128xf32>
    %cst_46 = arith.constant 1.000000e+00 : f32
    %134 = vector.broadcast %cst_46 : f32 to vector<8x128xf32>
    %135 = arith.minimumf %133, %134 : vector<8x128xf32>
    %cst_47 = arith.constant 5.000000e-01 : f32
    %136 = vector.broadcast %cst_47 : f32 to vector<8x128xf32>
    %137 = arith.mulf %136, %135 : vector<8x128xf32>
    %138 = arith.subf %133, %137 : vector<8x128xf32>
    %139 = arith.mulf %135, %138 : vector<8x128xf32>
    %140 = arith.mulf %139, %122 : vector<8x128xf32>
    %141 = arith.addf %131, %140 : vector<8x128xf32>
    %c0_48 = arith.constant 0 : index
    %c0_49 = arith.constant 0 : index
    %142 = vector.load %arg9[%c0_48, %c0_49] : memref<8x128xf32, #tpu.memory_space<vmem>>, vector<8x128xf32>
    %143 = vector.shape_cast %141 : vector<8x128xf32> to vector<1x8x128xf32>
    %cst_50 = arith.constant dense<0.000000e+00> : vector<8x128xf32>
    %144 = vector.multi_reduction <add>, %143, %cst_50 [0] : vector<1x8x128xf32> to vector<8x128xf32>
    %145 = arith.addf %142, %144 : vector<8x128xf32>
    %c0_51 = arith.constant 0 : index
    %c0_52 = arith.constant 0 : index
    %146 = vector.load %arg9[%c0_51, %c0_52] : memref<8x128xf32, #tpu.memory_space<vmem>>, vector<8x128xf32>
    tpu.vector_store %arg9[%c0_51, %c0_52], %145 {strides = array<i32>} : memref<8x128xf32, #tpu.memory_space<vmem>>, vector<8x128xf32>,
    %c0_i32_53 = arith.constant 0 : i32
    %147 = arith.cmpi eq, %arg1, %c0_i32_53 : i32
    %148 = arith.extui %147 : i1 to i32
    %c0_i32_54 = arith.constant 0 : i32
    %149 = arith.cmpi ne, %148, %c0_i32_54 : i32
    scf.if %149 {
      %c0_55 = arith.constant 0 : index
      %c0_56 = arith.constant 0 : index
      %150 = vector.load %arg9[%c0_55, %c0_56] : memref<8x128xf32, #tpu.memory_space<vmem>>, vector<8x128xf32>
      %c0_57 = arith.constant 0 : index
      %c0_58 = arith.constant 0 : index
      %c0_59 = arith.constant 0 : index
      %151 = vector.load %arg8[%c0_57, %c0_58, %c0_59] : memref<1x8x128xf32, #tpu.memory_space<vmem>>, vector<1x8x128xf32>
      %152 = vector.shape_cast %151 : vector<1x8x128xf32> to vector<8x128xf32>
      %153 = vector.shape_cast %150 : vector<8x128xf32> to vector<1x8x128xf32>
      tpu.vector_store %arg8[%c0_57, %c0_58, %c0_59], %153 {strides = array<i32>} : memref<1x8x128xf32, #tpu.memory_space<vmem>>, vector<1x8x128xf32>,
    } else {
    }
    return
  }
  func.func @transform_0(%arg0: i32, %arg1: i32) -> i32 {
    %c0_i32 = arith.constant 0 : i32
    %c0_i32_0 = arith.constant 0 : i32
    return %c0_i32 : i32
  }
  func.func @transform_1(%arg0: i32, %arg1: i32) -> i32 {
    %c0_i32 = arith.constant 0 : i32
    %c0_i32_0 = arith.constant 0 : i32
    return %c0_i32 : i32
  }
  func.func @transform_2(%arg0: i32, %arg1: i32) -> i32 {
    %c0_i32 = arith.constant 0 : i32
    %c0_i32_0 = arith.constant 0 : i32
    return %c0_i32 : i32
  }
  func.func @transform_3(%arg0: i32, %arg1: i32) -> i32 {
    %c0_i32 = arith.constant 0 : i32
    %c0_i32_0 = arith.constant 0 : i32
    return %c0_i32 : i32
  }
  func.func @transform_4(%arg0: i32, %arg1: i32) -> (i32, i32, i32, i32) {
    %c0_i32 = arith.constant 0 : i32
    %c0_i32_0 = arith.constant 0 : i32
    %c0_i32_1 = arith.constant 0 : i32
    return %arg0, %c0_i32, %arg1, %c0_i32_0 : i32, i32, i32, i32
  }
  func.func @transform_5(%arg0: i32, %arg1: i32) -> (i32, i32, i32, i32) {
    %c0_i32 = arith.constant 0 : i32
    %c0_i32_0 = arith.constant 0 : i32
    %c0_i32_1 = arith.constant 0 : i32
    return %arg0, %c0_i32, %arg1, %c0_i32_0 : i32, i32, i32, i32
  }
  func.func @transform_6(%arg0: i32, %arg1: i32) -> (i32, i32, i32) {
    %c0_i32 = arith.constant 0 : i32
    %c0_i32_0 = arith.constant 0 : i32
    %c0_i32_1 = arith.constant 0 : i32
    return %arg0, %c0_i32, %c0_i32_0 : i32, i32, i32
  }
}

</mosaic_0001>

<llo_original>
// kernel: tpu_custom_call.1
$region0: #{tpu_custom_call.1}
  #allocation0 [shape = 'u32[]', space=smem, size = 0x4, offset = 0x4, fixed_abs, tag = 'smem constant byte address 0x4 - core index']
  #allocation1 [shape = 'u32[72,128]{1,0:T(1,128)}', space=vmem, size = 0x9000, scoped, tag = 'internal scratch']
  #allocation2 [shape = 'f32[8,128]{1,0:T(8,128)}', space=vmem, size = 0x1000, scoped, tag = 'scratch operand']
  %s0 = inlined_call_operand.hbm [shape: f32[11], index: 0, kind: input, shape index: {}]
  %s1 = inlined_call_operand.hbm [shape: f32[11], index: 1, kind: input, shape index: {}]
  %s2 = inlined_call_operand.vmem [shape: f32[10], index: 2, kind: input, shape index: {}]
  %s3 = inlined_call_operand.vmem [shape: f32[10], index: 3, kind: input, shape index: {}]
  %s4 = inlined_call_operand.hbm [shape: f32[2,2,8,128], index: 4, kind: input, shape index: {}]
  %s5 = inlined_call_operand.hbm [shape: f32[2,2,8,128], index: 5, kind: input, shape index: {}]
  %s6 = inlined_call_operand.hbm [shape: f32[2,8,128], index: 6, kind: output, shape index: {}]
  %s7 = sld [smem:[#allocation0]]
  $region89: #{tpu_custom_call.1} parent=0
    _
  %s9 = ssub.s32 1, %s7
  %s10 = scalar_select 0, %s9, %s7
  $region1: #{tpu_custom_call.1} parent=0
    #allocation3 [shape = 'u8[512]{0}', space=smem, size = 0x200, scoped, tag = 'input window, operand 0, single buffered']
    #allocation4 [shape = 's32[2]{0}', space=sflag, size = 0x8, scoped, tag = 'scoped memory for tpu_custom_call.1']
    #allocation5 [shape = 's32[2]{0}', space=sflag, size = 0x8, scoped, tag = 'scoped memory for tpu_custom_call.1']
    #allocation6 [shape = 's32[2]{0}', space=sflag, size = 0x8, scoped, tag = 'scoped memory for tpu_custom_call.1']
    #allocation7 [shape = 's32[2]{0}', space=sflag, size = 0x8, scoped, tag = 'scoped memory for tpu_custom_call.1']
    #allocation8 [shape = 'u8[512]{0}', space=smem, size = 0x200, scoped, tag = 'input window, operand 1, single buffered']
    #allocation9 [shape = 's32[1]{0}', space=sflag, size = 0x4, scoped, tag = 'scoped memory for tpu_custom_call.1']
    #allocation10 [shape = 'u8[512]{0}', space=smem, size = 0x200, scoped, tag = 'input window, operand 2, single buffered']
    #allocation11 [shape = 'u8[512]{0}', space=smem, size = 0x200, scoped, tag = 'input window, operand 3, single buffered']
    #allocation12 [shape = 's32[1]{0}', space=sflag, size = 0x4, scoped, tag = 'scoped memory for tpu_custom_call.1']
    #allocation13 [shape = 'u8[16384]{0}', space=vmem, size = 0x4000, scoped, tag = 'input window, operand 4']
    #allocation14 [shape = 'u8[16384]{0}', space=vmem, size = 0x4000, scoped, tag = 'input window, operand 5']
    #allocation15 [shape = 's32[2]{0}', space=sflag, size = 0x8, scoped, tag = 'scoped memory for tpu_custom_call.1']
    #allocation16 [shape = 'u8[8192]{0}', space=vmem, size = 0x2000, scoped, tag = 'output window, operand 0']
    %11 = vsyncpa [#allocation6], 0
    %12 = vsyncpa [#allocation9], 0
    %13 = vsyncpa [#allocation7], 0
    %14 = vsyncpa [#allocation12], 0
    %15 = vsyncpa [#allocation4], 0
    %s16 = scalar_lea.sflag [#allocation4], 1
    %17 = vsyncpa %s16, 0
    %18 = vsyncpa [#allocation15], 0
    %s19 = scalar_lea.sflag [#allocation15], 1
    %20 = vsyncpa %s19, 0
    %21 = vsyncpa [#allocation5], 0
    %s22 = scalar_lea.sflag [#allocation5], 1
    %23 = vsyncpa %s22, 0
    loop: start=0, step=1, limit=4
    $region2: #{tpu_custom_call.1} parent=1 // loop_pre_header
      _
    $region3: #{tpu_custom_call.1} parent=1 // loop_header
      %s25 = sphi 0, %s29
      %p26 = scmp.ge.s32.totalorder %s25, 4
      %s32 = sphi 0, %s44
      %s33 = sphi 0, %s40
      %s34 = sphi 0, %s32
      %s35 = sphi 0, %s33
      %s36 = sphi 0, %s34
      %s37 = sphi 0, %s35
      %s45 = sphi 0, %s45
      %s47 = sphi 0, %s45
      %s48 = sphi 0, %s47
      %s62 = sphi 0, %s48
      %s66 = sphi 0, %s66
      %s68 = sphi 0, %s66
      %s69 = sphi 0, %s68
      %s83 = sphi 0, %s69
      %s87 = sphi 0, %s87
      %s89 = sphi 0, %s87
      %s90 = sphi 0, %s89
      %s104 = sphi 0, %s90
      %s108 = sphi 0, %s108
      %s110 = sphi 0, %s108
      %s111 = sphi 0, %s110
      %s125 = sphi 0, %s111
      %s133 = sphi 0, %s135
      %s136 = sphi 0, %s133
      %s137 = sphi 0, %s136
      %s153 = sphi 0, %s137
      %s161 = sphi 0, %s163
      %s164 = sphi 0, %s161
      %s165 = sphi 0, %s164
      %s181 = sphi 0, %s165
      %s187 = sphi 0, %s189
      %s190 = sphi 0, %s187
      %s191 = sphi 0, %s190
      %s207 = sphi 0, %s191
    $region4: #{tpu_custom_call.1} parent=1 // loop_header_branch
      %28 = sbr.rel (%p26) target = $region8
    $region5: #{tpu_custom_call.1} parent=1 // loop_body
      %s30 = ssub.s32 %s25, 1
      %s31 = ssub.s32 %s25, 2
      %s38 = sadd.s32 1, %s33
      %p39 = scmp.ge.s32.totalorder %s38, 1
      %s40 = scalar_select %p39, 0, %s38
      %s41 = sadd.s32 1, %s32
      %s42 = scalar_select %p39, %s41, %s32
      %p43 = scmp.ge.s32.totalorder %s42, 2
      %s44 = scalar_select %p43, 0, %s42
      %s46 = sadd.s32 %s45, 1
      %p49 = scmp.eq.s32.totalorder %s25, 1
      %p50 = scmp.ne.s32.totalorder %s45, %s47
      %p51 = scmp.eq.s32.totalorder %s25, 0
      %p52 = por %p50, %p51
      %p53 = scmp.ne.s32.totalorder %s45, %s47
      %p54 = scmp.eq.s32.totalorder %s30, 1
      %p55 = por %p53, %p54
      %p56 = scmp.ne.s32.totalorder %s47, %s48
      %p57 = scmp.eq.s32.totalorder %s30, 0
      %p58 = por %p56, %p57
      %p59 = scmp.ne.s32.totalorder %s47, %s48
      %p60 = scmp.eq.s32.totalorder %s31, 1
      %p61 = por %p59, %p60
      %p63 = scmp.ne.s32.totalorder %s48, %s62
      %p64 = scmp.eq.s32.totalorder %s31, 0
      %p65 = por %p63, %p64
      %s67 = sadd.s32 %s66, 1
      %p70 = scmp.eq.s32.totalorder %s25, 1
      %p71 = scmp.ne.s32.totalorder %s66, %s68
      %p72 = scmp.eq.s32.totalorder %s25, 0
      %p73 = por %p71, %p72
      %p74 = scmp.ne.s32.totalorder %s66, %s68
      %p75 = scmp.eq.s32.totalorder %s30, 1
      %p76 = por %p74, %p75
      %p77 = scmp.ne.s32.totalorder %s68, %s69
      %p78 = scmp.eq.s32.totalorder %s30, 0
      %p79 = por %p77, %p78
      %p80 = scmp.ne.s32.totalorder %s68, %s69
      %p81 = scmp.eq.s32.totalorder %s31, 1
      %p82 = por %p80, %p81
      %p84 = scmp.ne.s32.totalorder %s69, %s83
      %p85 = scmp.eq.s32.totalorder %s31, 0
      %p86 = por %p84, %p85
      %s88 = sadd.s32 %s87, 1
      %p91 = scmp.eq.s32.totalorder %s25, 1
      %p92 = scmp.ne.s32.totalorder %s87, %s89
      %p93 = scmp.eq.s32.totalorder %s25, 0
      %p94 = por %p92, %p93
      %p95 = scmp.ne.s32.totalorder %s87, %s89
      %p96 = scmp.eq.s32.totalorder %s30, 1
      %p97 = por %p95, %p96
      %p98 = scmp.ne.s32.totalorder %s89, %s90
      %p99 = scmp.eq.s32.totalorder %s30, 0
      %p100 = por %p98, %p99
      %p101 = scmp.ne.s32.totalorder %s89, %s90
      %p102 = scmp.eq.s32.totalorder %s31, 1
      %p103 = por %p101, %p102
      %p105 = scmp.ne.s32.totalorder %s90, %s104
      %p106 = scmp.eq.s32.totalorder %s31, 0
      %p107 = por %p105, %p106
      %s109 = sadd.s32 %s108, 1
      %p112 = scmp.eq.s32.totalorder %s25, 1
      %p113 = scmp.ne.s32.totalorder %s108, %s110
      %p114 = scmp.eq.s32.totalorder %s25, 0
      %p115 = por %p113, %p114
      %p116 = scmp.ne.s32.totalorder %s108, %s110
      %p117 = scmp.eq.s32.totalorder %s30, 1
      %p118 = por %p116, %p117
      %p119 = scmp.ne.s32.totalorder %s110, %s111
      %p120 = scmp.eq.s32.totalorder %s30, 0
      %p121 = por %p119, %p120
      %p122 = scmp.ne.s32.totalorder %s110, %s111
      %p123 = scmp.eq.s32.totalorder %s31, 1
      %p124 = por %p122, %p123
      %p126 = scmp.ne.s32.totalorder %s111, %s125
      %p127 = scmp.eq.s32.totalorder %s31, 0
      %p128 = por %p126, %p127
      %s129 = ssub.s32 %s32, %s44
      %s130 = ssub.s32 %s33, %s40
      %s131 = sor.u32 %s129, %s130
      %p132 = scmp.eq.s32.totalorder %s131, 0
      %s134 = sadd.s32 %s133, 1
      %s135 = scalar_select %p132, %s133, %s134
      %p138 = pneg %p132
      %p139 = scmp.eq.s32.totalorder %s25, 1
      %p140 = por %p138, %p139
      %p141 = scmp.ne.s32.totalorder %s133, %s136
      %p142 = scmp.eq.s32.totalorder %s25, 0
      %p143 = por %p141, %p142
      %p144 = scmp.ne.s32.totalorder %s133, %s136
      %p145 = scmp.eq.s32.totalorder %s30, 1
      %p146 = por %p144, %p145
      %p147 = scmp.ne.s32.totalorder %s136, %s137
      %p148 = scmp.eq.s32.totalorder %s30, 0
      %p149 = por %p147, %p148
      %p150 = scmp.ne.s32.totalorder %s136, %s137
      %p151 = scmp.eq.s32.totalorder %s31, 1
      %p152 = por %p150, %p151
      %p154 = scmp.ne.s32.totalorder %s137, %s153
      %p155 = scmp.eq.s32.totalorder %s31, 0
      %p156 = por %p154, %p155
      %s157 = ssub.s32 %s32, %s44
      %s158 = ssub.s32 %s33, %s40
      %s159 = sor.u32 %s157, %s158
      %p160 = scmp.eq.s32.totalorder %s159, 0
      %s162 = sadd.s32 %s161, 1
      %s163 = scalar_select %p160, %s161, %s162
      %p166 = pneg %p160
      %p167 = scmp.eq.s32.totalorder %s25, 1
      %p168 = por %p166, %p167
      %p169 = scmp.ne.s32.totalorder %s161, %s164
      %p170 = scmp.eq.s32.totalorder %s25, 0
      %p171 = por %p169, %p170
      %p172 = scmp.ne.s32.totalorder %s161, %s164
      %p173 = scmp.eq.s32.totalorder %s30, 1
      %p174 = por %p172, %p173
      %p175 = scmp.ne.s32.totalorder %s164, %s165
      %p176 = scmp.eq.s32.totalorder %s30, 0
      %p177 = por %p175, %p176
      %p178 = scmp.ne.s32.totalorder %s164, %s165
      %p179 = scmp.eq.s32.totalorder %s31, 1
      %p180 = por %p178, %p179
      %p182 = scmp.ne.s32.totalorder %s165, %s181
      %p183 = scmp.eq.s32.totalorder %s31, 0
      %p184 = por %p182, %p183
      %s185 = ssub.s32 %s32, %s44
      %p186 = scmp.eq.s32.totalorder %s185, 0
      %s188 = sadd.s32 %s187, 1
      %s189 = scalar_select %p186, %s187, %s188
      %p192 = pneg %p186
      %p193 = scmp.eq.s32.totalorder %s25, 1
      %p194 = por %p192, %p193
      %p195 = scmp.ne.s32.totalorder %s187, %s190
      %p196 = scmp.eq.s32.totalorder %s25, 0
      %p197 = por %p195, %p196
      %p198 = scmp.ne.s32.totalorder %s187, %s190
      %p199 = scmp.eq.s32.totalorder %s30, 1
      %p200 = por %p198, %p199
      %p201 = scmp.ne.s32.totalorder %s190, %s191
      %p202 = scmp.eq.s32.totalorder %s30, 0
      %p203 = por %p201, %p202
      %p204 = scmp.ne.s32.totalorder %s190, %s191
      %p205 = scmp.eq.s32.totalorder %s31, 1
      %p206 = por %p204, %p205
      %p208 = scmp.ne.s32.totalorder %s191, %s207
      %p209 = scmp.eq.s32.totalorder %s31, 0
      %p210 = por %p208, %p209
      %p211 = scmp.le.s32.totalorder 1, %s25
      %p212 = scmp.lt.s32.totalorder %s25, 3
      %p213 = pnand %p211, %p212
      %p214 = pneg %p213
      // Predicated region
      $region9: #{tpu_custom_call.1} parent=5 // pred_check
        _
      $region10: #{tpu_custom_call.1} parent=5 // pred_check_branch
        %216 = sbr.rel (%p213) target = $region12
      $region11: #{tpu_custom_call.1} parent=5 // pred_region
        %s217 = ssub.s32 %s25, 1
        // Predicated region
        $region13: #{tpu_custom_call.1} parent=11 // pred_check
          %p218 = pneg %p58
        $region14: #{tpu_custom_call.1} parent=11 // pred_check_branch
          %220 = sbr.rel (%p218) target = $region16
        $region15: #{tpu_custom_call.1} parent=11 // pred_region
          %222 = vsyncadd [#allocation6], 0
          %s224 = sshll.u32 %s0, 4
          %s225 = int_to_ptr.hbm [resolvable:$true] %s224
          %227 = dma.hbm_to_smem %s225, 16, [#allocation3], [#allocation6]
        $region16: #{tpu_custom_call.1} parent=11 // pred_fallthru
          _
        // Predicated region
        $region17: #{tpu_custom_call.1} parent=11 // pred_check
          %p228 = pneg %p79
        $region18: #{tpu_custom_call.1} parent=11 // pred_check_branch
          %230 = sbr.rel (%p228) target = $region20
        $region19: #{tpu_custom_call.1} parent=11 // pred_region
          %232 = vsyncadd [#allocation9], 0
          %s234 = sshll.u32 %s1, 4
          %s235 = int_to_ptr.hbm [resolvable:$true] %s234
          %237 = dma.hbm_to_smem %s235, 16, [#allocation8], [#allocation9]
        $region20: #{tpu_custom_call.1} parent=11 // pred_fallthru
          _
        // Predicated region
        $region21: #{tpu_custom_call.1} parent=11 // pred_check
          %p238 = pneg %p100
        $region22: #{tpu_custom_call.1} parent=11 // pred_check_branch
          %240 = sbr.rel (%p238) target = $region24
        $region23: #{tpu_custom_call.1} parent=11 // pred_region
          %242 = vsyncadd [#allocation7], 0
          %s244 = sshll.u32 %s2, 4
          %s245 = int_to_ptr.vmem [resolvable:$true] %s244
          %247 = dma.vmem_to_smem %s245, 16, [#allocation10], [#allocation7]
        $region24: #{tpu_custom_call.1} parent=11 // pred_fallthru
          _
        // Predicated region
        $region25: #{tpu_custom_call.1} parent=11 // pred_check
          %p248 = pneg %p121
        $region26: #{tpu_custom_call.1} parent=11 // pred_check_branch
          %250 = sbr.rel (%p248) target = $region28
        $region27: #{tpu_custom_call.1} parent=11 // pred_region
          %252 = vsyncadd [#allocation12], 0
          %s254 = sshll.u32 %s3, 4
          %s255 = int_to_ptr.vmem [resolvable:$true] %s254
          %257 = dma.vmem_to_smem %s255, 16, [#allocation11], [#allocation12]
        $region28: #{tpu_custom_call.1} parent=11 // pred_fallthru
          _
      $region12: #{tpu_custom_call.1} parent=5 // pred_fallthru
        _
      %p258 = scmp.lt.s32.totalorder %s25, 2
      // Predicated region
      $region29: #{tpu_custom_call.1} parent=5 // pred_check
        %p259 = pneg %p258
      $region30: #{tpu_custom_call.1} parent=5 // pred_check_branch
        %261 = sbr.rel (%p259) target = $region32
      $region31: #{tpu_custom_call.1} parent=5 // pred_region
        // Predicated region
        $region33: #{tpu_custom_call.1} parent=31 // pred_check
          %p262 = pneg %p143
        $region34: #{tpu_custom_call.1} parent=31 // pred_check_branch
          %264 = sbr.rel (%p262) target = $region36
        $region35: #{tpu_custom_call.1} parent=31 // pred_region
          %s265 = sand.u32 %s133, 1
          %s266 = scalar_lea.sflag [#allocation4], %s265
          %s267 = sand.u32 %s133, 1
          %s268 = smul.addr %s267, 16
          %s269 = scalar_lea.vmem [#allocation13], %s268
          %271 = vsyncadd %s266, 0
          %s272 = smul.addr %s32, 2
          %s273 = sadd.s32 %s33, %s272
          %s274 = smul.addr %s273, 8
          %s275 = scalar_lea.hbm %s4, %s274
          %s276 = sshll.u32 %s275, 4
          %s277 = int_to_ptr.hbm [resolvable:$true] %s276
          %s278 = sshll.u32 %s269, 4
          %s279 = int_to_ptr.vmem [resolvable:$true] %s278
          %284 = dma.hbm_to_vmem [thread:$0]  %s277, 256, %s279, %s266, 128, 128, 8
        $region36: #{tpu_custom_call.1} parent=31 // pred_fallthru
          _
        // Predicated region
        $region37: #{tpu_custom_call.1} parent=31 // pred_check
          %p285 = pneg %p171
        $region38: #{tpu_custom_call.1} parent=31 // pred_check_branch
          %287 = sbr.rel (%p285) target = $region40
        $region39: #{tpu_custom_call.1} parent=31 // pred_region
          %s288 = sand.u32 %s161, 1
          %s289 = scalar_lea.sflag [#allocation15], %s288
          %s290 = sand.u32 %s161, 1
          %s291 = smul.addr %s290, 16
          %s292 = scalar_lea.vmem [#allocation14], %s291
          %294 = vsyncadd %s289, 0
          %s295 = smul.addr %s32, 2
          %s296 = sadd.s32 %s33, %s295
          %s297 = smul.addr %s296, 8
          %s298 = scalar_lea.hbm %s5, %s297
          %s299 = sshll.u32 %s298, 4
          %s300 = int_to_ptr.hbm [resolvable:$true] %s299
          %s301 = sshll.u32 %s292, 4
          %s302 = int_to_ptr.vmem [resolvable:$true] %s301
          %307 = dma.hbm_to_vmem [thread:$0]  %s300, 256, %s302, %s289, 128, 128, 8
        $region40: #{tpu_custom_call.1} parent=31 // pred_fallthru
          _
      $region32: #{tpu_custom_call.1} parent=5 // pred_fallthru
        _
      %p308 = scmp.le.s32.totalorder 1, %s25
      %p309 = scmp.lt.s32.totalorder %s25, 3
      %p310 = pnand %p308, %p309
      %p311 = pneg %p310
      // Predicated region
      $region41: #{tpu_custom_call.1} parent=5 // pred_check
        _
      $region42: #{tpu_custom_call.1} parent=5 // pred_check_branch
        %313 = sbr.rel (%p310) target = $region44
      $region43: #{tpu_custom_call.1} parent=5 // pred_region
        %s314 = ssub.s32 %s25, 1
        // Predicated region
        $region45: #{tpu_custom_call.1} parent=43 // pred_check
          %p315 = pneg %p58
        $region46: #{tpu_custom_call.1} parent=43 // pred_check_branch
          %317 = sbr.rel (%p315) target = $region48
        $region47: #{tpu_custom_call.1} parent=43 // pred_region
          %319 = dma.done [#allocation6], 16
        $region48: #{tpu_custom_call.1} parent=43 // pred_fallthru
          _
        // Predicated region
        $region49: #{tpu_custom_call.1} parent=43 // pred_check
          %p320 = pneg %p79
        $region50: #{tpu_custom_call.1} parent=43 // pred_check_branch
          %322 = sbr.rel (%p320) target = $region52
        $region51: #{tpu_custom_call.1} parent=43 // pred_region
          %324 = dma.done [#allocation9], 16
        $region52: #{tpu_custom_call.1} parent=43 // pred_fallthru
          _
        // Predicated region
        $region53: #{tpu_custom_call.1} parent=43 // pred_check
          %p325 = pneg %p100
        $region54: #{tpu_custom_call.1} parent=43 // pred_check_branch
          %327 = sbr.rel (%p325) target = $region56
        $region55: #{tpu_custom_call.1} parent=43 // pred_region
          %329 = dma.done [#allocation7], 16
        $region56: #{tpu_custom_call.1} parent=43 // pred_fallthru
          _
        // Predicated region
        $region57: #{tpu_custom_call.1} parent=43 // pred_check
          %p330 = pneg %p121
        $region58: #{tpu_custom_call.1} parent=43 // pred_check_branch
          %332 = sbr.rel (%p330) target = $region60
        $region59: #{tpu_custom_call.1} parent=43 // pred_region
          %334 = dma.done [#allocation12], 16
        $region60: #{tpu_custom_call.1} parent=43 // pred_fallthru
          _
        %s335 = sand.u32 %s136, 1
        %s336 = scalar_lea.sflag [#allocation4], %s335
        %s337 = sand.u32 %s136, 1
        %s338 = smul.addr %s337, 16
        %s339 = scalar_lea.vmem [#allocation13], %s338
        // Predicated region
        $region61: #{tpu_custom_call.1} parent=43 // pred_check
          %p340 = pneg %p149
        $region62: #{tpu_custom_call.1} parent=43 // pred_check_branch
          %342 = sbr.rel (%p340) target = $region64
        $region63: #{tpu_custom_call.1} parent=43 // pred_region
          %344 = dma.done %s336, 256
        $region64: #{tpu_custom_call.1} parent=43 // pred_fallthru
          _
        %s345 = sand.u32 %s164, 1
        %s346 = scalar_lea.sflag [#allocation15], %s345
        %s347 = sand.u32 %s164, 1
        %s348 = smul.addr %s347, 16
        %s349 = scalar_lea.vmem [#allocation14], %s348
        // Predicated region
        $region65: #{tpu_custom_call.1} parent=43 // pred_check
          %p350 = pneg %p177
        $region66: #{tpu_custom_call.1} parent=43 // pred_check_branch
          %352 = sbr.rel (%p350) target = $region68
        $region67: #{tpu_custom_call.1} parent=43 // pred_region
          %354 = dma.done %s346, 256
        $region68: #{tpu_custom_call.1} parent=43 // pred_fallthru
          _
        %355 = sfence
        %p356 = pneg %p58
        %p357 = pneg %p55
        %p358 = pneg %p79
        %p359 = pneg %p76
        %p360 = pneg %p100
        %p361 = pneg %p97
        %p362 = pneg %p121
        %p363 = pneg %p118
        %s364 = sand.u32 %s136, 1
        %s365 = scalar_lea.sflag [#allocation4], %s364
        %s366 = sand.u32 %s136, 1
        %s367 = smul.addr %s366, 16
        %s368 = scalar_lea.vmem [#allocation13], %s367
        %p369 = pneg %p149
        %p370 = pneg %p146
        %s371 = sand.u32 %s164, 1
        %s372 = scalar_lea.sflag [#allocation15], %s371
        %s373 = sand.u32 %s164, 1
        %s374 = smul.addr %s373, 16
        %s375 = scalar_lea.vmem [#allocation14], %s374
        %p376 = pneg %p177
        %p377 = pneg %p174
        %p378 = pneg %p203
        %p379 = pneg %p200
        %s380 = sand.u32 %s190, 1
        %s381 = scalar_lea.sflag [#allocation5], %s380
        %s382 = sand.u32 %s190, 1
        %s383 = smul.addr %s382, 8
        %s384 = scalar_lea.vmem [#allocation16], %s383
        %p385 = scmp.eq.s32.totalorder %s35, 0
        // Predicated region
        $region69: #{tpu_custom_call.1} parent=43 // pred_check
          %p386 = pneg %p385
        $region70: #{tpu_custom_call.1} parent=43 // pred_check_branch
          %388 = sbr.rel (%p386) target = $region72
        $region71: #{tpu_custom_call.1} parent=43 // pred_region
          %389 = vst [vmem:[#allocation2] sm:$0xff] 0.0
        $region72: #{tpu_custom_call.1} parent=43 // pred_fallthru
          _
        %v390 = vld [vmem:[%s339] sm:$0xff]
        %s391 = scalar_lea.vmem %s339, 8 [#allocation13]
        %v392 = vld [vmem:[%s391] sm:$0xff]
        %v393 = vld [vmem:[%s349] sm:$0xff]
        %s394 = scalar_lea.vmem %s349, 8 [#allocation14]
        %v395 = vld [vmem:[%s394] sm:$0xff]
        %s396 = sld [smem:[#allocation10]]
        %v397 = vstv %s396
        %s398 = sld [smem:[#allocation3 + $0x1]]
        %v399 = vstv %s398
        %vm400 = vcmp.gt.f32.partialorder %v393, %v399
        %s401 = sld [smem:[#allocation10 + $0x1]]
        %v402 = vstv %s401
        %v403 = vsel %vm400, %v402, %v397
        %s404 = sld [smem:[#allocation3 + $0x2]]
        %v405 = vstv %s404
        %vm406 = vcmp.gt.f32.partialorder %v393, %v405
        %s407 = sld [smem:[#allocation10 + $0x2]]
        %v408 = vstv %s407
        %v409 = vsel %vm406, %v408, %v403
        %s410 = sld [smem:[#allocation3 + $0x3]]
        %v411 = vstv %s410
        %vm412 = vcmp.gt.f32.partialorder %v393, %v411
        %s413 = sld [smem:[#allocation10 + $0x3]]
        %v414 = vstv %s413
        %v415 = vsel %vm412, %v414, %v409
        %s416 = sld [smem:[#allocation3 + $0x4]]
        %v417 = vstv %s416
        %vm418 = vcmp.gt.f32.partialorder %v393, %v417
        %s419 = sld [smem:[#allocation10 + $0x4]]
        %v420 = vstv %s419
        %v421 = vsel %vm418, %v420, %v415
        %s422 = sld [smem:[#allocation3 + $0x5]]
        %v423 = vstv %s422
        %vm424 = vcmp.gt.f32.partialorder %v393, %v423
        %s425 = sld [smem:[#allocation10 + $0x5]]
        %v426 = vstv %s425
        %v427 = vsel %vm424, %v426, %v421
        %s428 = sld [smem:[#allocation3 + $0x6]]
        %v429 = vstv %s428
        %vm430 = vcmp.gt.f32.partialorder %v393, %v429
        %s431 = sld [smem:[#allocation10 + $0x6]]
        %v432 = vstv %s431
        %v433 = vsel %vm430, %v432, %v427
        %s434 = sld [smem:[#allocation3 + $0x7]]
        %v435 = vstv %s434
        %vm436 = vcmp.gt.f32.partialorder %v393, %v435
        %s437 = sld [smem:[#allocation10 + $0x7]]
        %v438 = vstv %s437
        %v439 = vsel %vm436, %v438, %v433
        %s440 = sld [smem:[#allocation3 + $0x8]]
        %v441 = vstv %s440
        %vm442 = vcmp.gt.f32.partialorder %v393, %v441
        %s443 = sld [smem:[#allocation10 + $0x8]]
        %v444 = vstv %s443
        %v445 = vsel %vm442, %v444, %v439
        %s446 = sld [smem:[#allocation3 + $0x9]]
        %v447 = vstv %s446
        %vm448 = vcmp.gt.f32.partialorder %v393, %v447
        %s449 = sld [smem:[#allocation10 + $0x9]]
        %v450 = vstv %s449
        %v451 = vsel %vm448, %v450, %v445
        %s452 = sld [smem:[#allocation11]]
        %v453 = vstv %s452
        %s454 = sld [smem:[#allocation8 + $0x1]]
        %v455 = vstv %s454
        %vm456 = vcmp.gt.f32.partialorder %v395, %v455
        %s457 = sld [smem:[#allocation11 + $0x1]]
        %v458 = vstv %s457
        %v459 = vsel %vm456, %v458, %v453
        %s460 = sld [smem:[#allocation8 + $0x2]]
        %v461 = vstv %s460
        %vm462 = vcmp.gt.f32.partialorder %v395, %v461
        %s463 = sld [smem:[#allocation11 + $0x2]]
        %v464 = vstv %s463
        %v465 = vsel %vm462, %v464, %v459
        %s466 = sld [smem:[#allocation8 + $0x3]]
        %v467 = vstv %s466
        %vm468 = vcmp.gt.f32.partialorder %v395, %v467
        %s469 = sld [smem:[#allocation11 + $0x3]]
        %v470 = vstv %s469
        %v471 = vsel %vm468, %v470, %v465
        %s472 = sld [smem:[#allocation8 + $0x4]]
        %v473 = vstv %s472
        %vm474 = vcmp.gt.f32.partialorder %v395, %v473
        %s475 = sld [smem:[#allocation11 + $0x4]]
        %v476 = vstv %s475
        %v477 = vsel %vm474, %v476, %v471
        %s478 = sld [smem:[#allocation8 + $0x5]]
        %v479 = vstv %s478
        %vm480 = vcmp.gt.f32.partialorder %v395, %v479
        %s481 = sld [smem:[#allocation11 + $0x5]]
        %v482 = vstv %s481
        %v483 = vsel %vm480, %v482, %v477
        %s484 = sld [smem:[#allocation8 + $0x6]]
        %v485 = vstv %s484
        %vm486 = vcmp.gt.f32.partialorder %v395, %v485
        %s487 = sld [smem:[#allocation11 + $0x6]]
        %v488 = vstv %s487
        %v489 = vsel %vm486, %v488, %v483
        %s490 = sld [smem:[#allocation8 + $0x7]]
        %v491 = vstv %s490
        %vm492 = vcmp.gt.f32.partialorder %v395, %v491
        %s493 = sld [smem:[#allocation11 + $0x7]]
        %v494 = vstv %s493
        %v495 = vsel %vm492, %v494, %v489
        %s496 = sld [smem:[#allocation8 + $0x8]]
        %v497 = vstv %s496
        %vm498 = vcmp.gt.f32.partialorder %v395, %v497
        %s499 = sld [smem:[#allocation11 + $0x8]]
        %v500 = vstv %s499
        %v501 = vsel %vm498, %v500, %v495
        %s502 = sld [smem:[#allocation8 + $0x9]]
        %v503 = vstv %s502
        %vm504 = vcmp.gt.f32.partialorder %v395, %v503
        %s505 = sld [smem:[#allocation11 + $0x9]]
        %v506 = vstv %s505
        %v507 = vsel %vm504, %v506, %v501
        %v508 = vsub.f32 %v390, %v393
        %v509 = vand.u32 2147483647, %v508
        %v510 = vmin.f32 %v509, 1.0
        %v511 = vmul.f32 %v510, 0.5
        %v512 = vsub.f32 %v509, %v511
        %v513 = vmul.f32 %v510, %v512
        %v514 = vmul.f32 %v513, %v451
        %v515 = vsub.f32 %v392, %v395
        %v516 = vand.u32 2147483647, %v515
        %v517 = vmin.f32 %v516, 1.0
        %v518 = vmul.f32 %v517, 0.5
        %v519 = vsub.f32 %v516, %v518
        %v520 = vmul.f32 %v517, %v519
        %v521 = vmul.f32 %v520, %v507
        %v522 = vadd.f32 %v514, %v521
        %v523 = vld [vmem:[#allocation2] sm:$0xff]
        %v524 = vadd.f32 %v522, 0.0
        %v525 = vadd.f32 %v523, %v524
        %526 = vst [vmem:[#allocation2] sm:$0xff] %v525
        // Predicated region
        $region73: #{tpu_custom_call.1} parent=43 // pred_check
          %p527 = pneg %p385
        $region74: #{tpu_custom_call.1} parent=43 // pred_check_branch
          %529 = sbr.rel (%p527) target = $region76
        $region75: #{tpu_custom_call.1} parent=43 // pred_region
          %v530 = vld [vmem:[#allocation2] sm:$0xff]
          %531 = vst [vmem:[%s384] sm:$0xff] %v530
        $region76: #{tpu_custom_call.1} parent=43 // pred_fallthru
          _
        %s532 = sand.u32 %s190, 1
        %s533 = scalar_lea.sflag [#allocation5], %s532
        %s534 = sand.u32 %s190, 1
        %s535 = smul.addr %s534, 8
        %s536 = scalar_lea.vmem [#allocation16], %s535
        // Predicated region
        $region77: #{tpu_custom_call.1} parent=43 // pred_check
          %p537 = pneg %p200
        $region78: #{tpu_custom_call.1} parent=43 // pred_check_branch
          %539 = sbr.rel (%p537) target = $region80
        $region79: #{tpu_custom_call.1} parent=43 // pred_region
          %541 = vsyncadd %s533, 0
          %s542 = smul.addr %s34, 8
          %s543 = scalar_lea.hbm %s6, %s542
          %s545 = sshll.u32 %s536, 4
          %s546 = int_to_ptr.vmem [resolvable:$true] %s545
          %s547 = sshll.u32 %s543, 4
          %s548 = int_to_ptr.hbm [resolvable:$true] %s547
          %550 = dma.vmem_to_hbm [thread:$0]  %s546, 128, %s548, %s533
        $region80: #{tpu_custom_call.1} parent=43 // pred_fallthru
          _
      $region44: #{tpu_custom_call.1} parent=5 // pred_fallthru
        _
      %p551 = scmp.le.s32.totalorder 2, %s25
      // Predicated region
      $region81: #{tpu_custom_call.1} parent=5 // pred_check
        %p552 = pneg %p551
      $region82: #{tpu_custom_call.1} parent=5 // pred_check_branch
        %554 = sbr.rel (%p552) target = $region84
      $region83: #{tpu_custom_call.1} parent=5 // pred_region
        %s555 = ssub.s32 %s25, 2
        // Predicated region
        $region85: #{tpu_custom_call.1} parent=83 // pred_check
          %p556 = pneg %p206
        $region86: #{tpu_custom_call.1} parent=83 // pred_check_branch
          %558 = sbr.rel (%p556) target = $region88
        $region87: #{tpu_custom_call.1} parent=83 // pred_region
          %s559 = sand.u32 %s191, 1
          %s560 = scalar_lea.sflag [#allocation5], %s559
          %s561 = sand.u32 %s191, 1
          %s562 = smul.addr %s561, 8
          %s563 = scalar_lea.vmem [#allocation16], %s562
          %565 = dma.done %s560, 128
        $region88: #{tpu_custom_call.1} parent=83 // pred_fallthru
          _
      $region84: #{tpu_custom_call.1} parent=5 // pred_fallthru
        _
    $region6: #{tpu_custom_call.1} parent=1 // loop_footer
      %s29 = sadd.s32 1, %s25
    $region7: #{tpu_custom_call.1} parent=1 // loop_footer_branch
      %24 = sbr.rel target = $region3
    $region8: #{tpu_custom_call.1} parent=1 // loop_exit
      _
    %566 = vsyncpa [#allocation4], 1
    %s567 = scalar_lea.sflag [#allocation4], 1
    %568 = vsyncpa %s567, 1
    %569 = vsyncpa [#allocation15], 1
    %s570 = scalar_lea.sflag [#allocation15], 1
    %571 = vsyncpa %s570, 1
    %572 = vsyncpa [#allocation5], 1
    %s573 = scalar_lea.sflag [#allocation5], 1
    %574 = vsyncpa %s573, 1
    %575 = vsyncpa [#allocation6], 1
    %s576 = scalar_lea.sflag [#allocation6], 1
    %577 = vsyncpa %s576, 1
    %578 = vsyncpa [#allocation9], 1
    %579 = vsyncpa [#allocation7], 1
    %s580 = scalar_lea.sflag [#allocation7], 1
    %581 = vsyncpa %s580, 1
    %582 = vsyncpa [#allocation12], 1

</llo_original>
